<compile_context>
chip_gen: v7x
topology: tpu7x:2x2x1
jax: 0.10.0
libtpu: 0.0.40
codegen_flags: <defaults>
</compile_context>

<pallas_src>
import functools

import numpy as np
import jax
import jax.numpy as jnp
from jax.experimental import pallas as pl
from jax.experimental.pallas import tpu as pltpu


def _get_roi_kernel(params_ref, anchor_ref, mesh_ref, stats_ref, *, hl):
    """One grid step over a (tm, 2) slab of anchors.

    params_ref : (2, L)  f32  row 0 = interpolation parameter t per output lane
                              row 1 = 1.0 where the lane is an x-channel, else 0.0
    anchor_ref : (tm, 2) f32  [ax, ay] per anchor
    mesh_ref   : (tm, L) f32  meshgrid, lanes already in (i, j, c) interleaved order
    stats_ref  : (tm, 4) f32  [xmin, ymin, len_x, len_y]
    """
    a = anchor_ref[...]                       # (tm, 2)
    bmin = jnp.clip(a - hl, 0.0, 1.0)         # torch.clamp(anchor - half_length, 0, 1)
    bmax = jnp.clip(a + hl, 0.0, 1.0)         # torch.clamp(anchor + half_length, 0, 1)
    blen = bmax - bmin                        # bounding_length

    # Merged tiny outputs: one 4-lane stream instead of two 2-lane streams.
    stats_ref[:, 0:2] = bmin
    stats_ref[:, 2:4] = blen

    xmin = bmin[:, 0:1]                       # (tm, 1) sublane columns -> lane broadcast
    ymin = bmin[:, 1:2]
    lx = blen[:, 0:1]
    ly = blen[:, 1:2]

    t = params_ref[0:1, :]                    # (1, L) resident parameter row
    is_x = params_ref[1:2, :] > 0.5           # (1, L) channel mask

    base = jnp.where(is_x, xmin, ymin)        # (tm, L) via broadcast + select
    leng = jnp.where(is_x, lx, ly)
    # align_corners=True linear interp:  min + length * t  — single full-width slab store
    mesh_ref[...] = base + leng * t


@functools.lru_cache(maxsize=None)
def _param_rows(P, L, inv_pm1):
    """Precompute per-lane (t, is_x) rows for the interleaved (i, j, c) lane order."""
    lane = np.arange(L)
    c = lane % 2                              # channel: 0 -> x, 1 -> y
    i = (lane // (2 * P)) % P                 # row index (x varies with i)
    j = (lane // 2) % P                       # col index (y varies with j)
    t = np.where(c == 0, i, j).astype(np.float32) * np.float32(inv_pm1)
    is_x = (c == 0).astype(np.float32)
    return jnp.asarray(np.stack([t, is_x], axis=0))   # (2, L)


def _pick_tile_m(M, L):
    """Rows per grid step.  Single block when small; VMEM-sized tile when large."""
    if M <= 2048:
        return M                              # one block: no per-step pipeline overhead
    # Double-buffered mesh tile ~<= 4 MiB: fits v7x's 64 MiB physical / 32 MiB
    # default-scoped VMEM comfortably (and is trivially fine on v5e/v6e).
    tm = (4 << 20) // (2 * 4 * L)
    tm = max(512, min(tm, 4096, M))
    return (tm // 8) * 8                      # keep the blocked dim a multiple of 8


def get_roi_pallas(anchor, *, num_points, half_length, img_size):
    """Returns (meshgrid, bounding_length, bounding_min) matching the torch module."""
    anchor = anchor.astype(jnp.float32)
    B, N, _ = anchor.shape
    P = int(num_points)
    PP = P * P
    M = B * N
    lanes = 2 * PP
    L = ((lanes + 127) // 128) * 128          # lane-dense (unmasked vst) for any P

    hl = float(half_length) / float(img_size)         # compile-time constant
    inv_pm1 = 1.0 / (P - 1) if P > 1 else 0.0          # P==1 -> mesh collapses to bounding_min

    a2 = anchor.reshape(M, 2)                 # fold B,N onto the sublane axis (free reshape)
    params = _param_rows(P, L, inv_pm1)

    tm = _pick_tile_m(M, L)
    grid = (pl.cdiv(M, tm),)                  # ragged last block handled by Pallas masking

    kernel = functools.partial(_get_roi_kernel, hl=hl)
    mesh_flat, stats = pl.pallas_call(
        kernel,
        out_shape=(
            jax.ShapeDtypeStruct((M, L), jnp.float32),
            jax.ShapeDtypeStruct((M, 4), jnp.float32),
        ),
        grid=grid,
        in_specs=[
            pl.BlockSpec((2, L), lambda i: (0, 0)),    # resident parameter rows
            pl.BlockSpec((tm, 2), lambda i: (i, 0)),   # anchors
        ],
        out_specs=(
            pl.BlockSpec((tm, L), lambda i: (i, 0)),   # meshgrid slab (lane-dense)
            pl.BlockSpec((tm, 4), lambda i: (i, 0)),   # merged bmin/blen
        ),
        compiler_params=pltpu.CompilerParams(dimension_semantics=("parallel",)),
    )(params, a2)

    # glue: only a free reshape (interleaved lane order == torch (B,N,P,P,2) order);
    # the lane pad (if any) is sliced off before the reshape.
    if L != lanes:
        mesh_flat = mesh_flat[:, :lanes]
    meshgrid = mesh_flat.reshape(B, N, P, P, 2)
    bounding_min = stats[:, 0:2].reshape(B, N, 2)
    bounding_length = stats[:, 2:4].reshape(B, N, 2)
    return meshgrid, bounding_length, bounding_min


def _get_roi_ref(anchor, *, num_points, half_length, img_size):
    """Pure-JAX reference mirroring the PyTorch module (for correctness check)."""
    P = num_points
    hl = half_length / img_size
    bmin = jnp.clip(anchor - hl, 0.0, 1.0)
    bmax = jnp.clip(anchor + hl, 0.0, 1.0)
    blen = bmax - bmin
    if P > 1:
        t = jnp.arange(P, dtype=jnp.float32) / (P - 1)
    else:
        t = jnp.zeros((P,), jnp.float32)
    xs = bmin[..., 0:1] + blen[..., 0:1] * t            # (B, N, P), varies along i
    ys = bmin[..., 1:2] + blen[..., 1:2] * t            # (B, N, P), varies along j
    B, N, _ = anchor.shape
    xs = jnp.broadcast_to(xs[:, :, :, None], (B, N, P, P))
    ys = jnp.broadcast_to(ys[:, :, None, :], (B, N, P, P))
    mesh = jnp.stack([xs, ys], axis=-1)
    return mesh, blen, bmin


if __name__ == "__main__":
    key = jax.random.PRNGKey(0)
    B, N = 2, 8               # batch, number of anchor points
    num_points = 8            # ROI grid resolution per side (2*P*P = 128 lanes)
    half_length = 4.0
    img_size = 16.0

    # anchors are normalized coordinates in [0, 1]
    anchor = jax.random.uniform(key, (B, N, 2), dtype=jnp.float32)

    meshgrid, bounding_length, bounding_min = get_roi_pallas(
        anchor, num_points=num_points, half_length=half_length, img_size=img_size
    )
    jax.block_until_ready((meshgrid, bounding_length, bounding_min))

    assert meshgrid.shape == (B, N, num_points, num_points, 2)
    assert bounding_length.shape == (B, N, 2)
    assert bounding_min.shape == (B, N, 2)

    mesh_r, blen_r, bmin_r = _get_roi_ref(
        anchor, num_points=num_points, half_length=half_length, img_size=img_size
    )
    assert jnp.allclose(meshgrid, mesh_r, atol=1e-5)
    assert jnp.allclose(bounding_length, blen_r, atol=1e-5)
    assert jnp.allclose(bounding_min, bmin_r, atol=1e-5)

    print("KERNEL_OK")
</pallas_src>

<mosaic_0001>
module attributes {stable_mosaic.version = 11 : i64} {
  func.func @_get_roi_kernel(%arg0: i32, %arg1: memref<2x128xf32, #tpu.memory_space<vmem>>, %arg2: memref<16x2xf32, #tpu.memory_space<vmem>>, %arg3: memref<16x128xf32, #tpu.memory_space<vmem>>, %arg4: memref<16x4xf32, #tpu.memory_space<vmem>>) attributes {dimension_semantics = [#tpu.dimension_semantics<parallel>], iteration_bounds = array<i64: 1>, scalar_prefetch = 0 : i64, scratch_operands = 0 : i64, tpu.core_type = #tpu.core_type<tc>, window_params = [{pipeline_mode = #tpu.pipeline_mode<synchronous>, transform_indices = @transform_0, window_bounds = array<i64: 2, 128>}, {transform_indices = @transform_1, window_bounds = array<i64: 16, 2>}, {transform_indices = @transform_2, window_bounds = array<i64: 16, 128>}, {transform_indices = @transform_3, window_bounds = array<i64: 16, 4>}]} {
    %c0 = arith.constant 0 : index
    %c0_0 = arith.constant 0 : index
    %0 = vector.load %arg2[%c0, %c0_0] : memref<16x2xf32, #tpu.memory_space<vmem>>, vector<16x2xf32>
    %cst = arith.constant 2.500000e-01 : f32
    %1 = vector.broadcast %cst : f32 to vector<16x2xf32>
    %2 = arith.subf %0, %1 : vector<16x2xf32>
    %cst_1 = arith.constant 0.000000e+00 : f32
    %cst_2 = arith.constant 1.000000e+00 : f32
    %3 = vector.broadcast %cst_1 : f32 to vector<16x2xf32>
    %4 = arith.maximumf %3, %2 : vector<16x2xf32>
    %5 = vector.broadcast %cst_2 : f32 to vector<16x2xf32>
    %6 = arith.minimumf %5, %4 : vector<16x2xf32>
    %cst_3 = arith.constant 2.500000e-01 : f32
    %7 = vector.broadcast %cst_3 : f32 to vector<16x2xf32>
    %8 = arith.addf %0, %7 : vector<16x2xf32>
    %cst_4 = arith.constant 0.000000e+00 : f32
    %cst_5 = arith.constant 1.000000e+00 : f32
    %9 = vector.broadcast %cst_4 : f32 to vector<16x2xf32>
    %10 = arith.maximumf %9, %8 : vector<16x2xf32>
    %11 = vector.broadcast %cst_5 : f32 to vector<16x2xf32>
    %12 = arith.minimumf %11, %10 : vector<16x2xf32>
    %13 = arith.subf %12, %6 : vector<16x2xf32>
    %c0_6 = arith.constant 0 : index
    %c0_7 = arith.constant 0 : index
    %14 = vector.load %arg4[%c0_6, %c0_7] : memref<16x4xf32, #tpu.memory_space<vmem>>, vector<16x2xf32>
    tpu.vector_store %arg4[%c0_6, %c0_7], %6 {strides = array<i32>} : memref<16x4xf32, #tpu.memory_space<vmem>>, vector<16x2xf32>,
    %c0_8 = arith.constant 0 : index
    %c2 = arith.constant 2 : index
    %15 = vector.load %arg4[%c0_8, %c2] : memref<16x4xf32, #tpu.memory_space<vmem>>, vector<16x2xf32>
    tpu.vector_store %arg4[%c0_8, %c2], %13 {strides = array<i32>} : memref<16x4xf32, #tpu.memory_space<vmem>>, vector<16x2xf32>,
    %16 = vector.extract_strided_slice %6 {offsets = [0, 0], sizes = [16, 1], strides = [1, 1]} : vector<16x2xf32> to vector<16x1xf32>
    %17 = vector.extract_strided_slice %6 {offsets = [0, 1], sizes = [16, 1], strides = [1, 1]} : vector<16x2xf32> to vector<16x1xf32>
    %18 = vector.extract_strided_slice %13 {offsets = [0, 0], sizes = [16, 1], strides = [1, 1]} : vector<16x2xf32> to vector<16x1xf32>
    %19 = vector.extract_strided_slice %13 {offsets = [0, 1], sizes = [16, 1], strides = [1, 1]} : vector<16x2xf32> to vector<16x1xf32>
    %c0_9 = arith.constant 0 : index
    %c0_10 = arith.constant 0 : index
    %20 = vector.load %arg1[%c0_9, %c0_10] : memref<2x128xf32, #tpu.memory_space<vmem>>, vector<1x128xf32>
    %c1 = arith.constant 1 : index
    %c0_11 = arith.constant 0 : index
    %21 = vector.load %arg1[%c1, %c0_11] : memref<2x128xf32, #tpu.memory_space<vmem>>, vector<1x128xf32>
    %cst_12 = arith.constant 5.000000e-01 : f32
    %22 = vector.broadcast %cst_12 : f32 to vector<1x128xf32>
    %23 = arith.cmpf ogt, %21, %22 : vector<1x128xf32>
    %24 = vector.shape_cast %23 : vector<1x128xi1> to vector<1x128xi1>
    %25 = vector.broadcast %24 : vector<1x128xi1> to vector<16x128xi1>
    %26 = vector.shape_cast %16 : vector<16x1xf32> to vector<16x1xf32>
    %27 = vector.broadcast %26 : vector<16x1xf32> to vector<16x128xf32>
    %28 = vector.shape_cast %17 : vector<16x1xf32> to vector<16x1xf32>
    %29 = vector.broadcast %28 : vector<16x1xf32> to vector<16x128xf32>
    %30 = arith.select %25, %27, %29 : vector<16x128xi1>, vector<16x128xf32>
    %31 = vector.shape_cast %23 : vector<1x128xi1> to vector<1x128xi1>
    %32 = vector.broadcast %31 : vector<1x128xi1> to vector<16x128xi1>
    %33 = vector.shape_cast %18 : vector<16x1xf32> to vector<16x1xf32>
    %34 = vector.broadcast %33 : vector<16x1xf32> to vector<16x128xf32>
    %35 = vector.shape_cast %19 : vector<16x1xf32> to vector<16x1xf32>
    %36 = vector.broadcast %35 : vector<16x1xf32> to vector<16x128xf32>
    %37 = arith.select %32, %34, %36 : vector<16x128xi1>, vector<16x128xf32>
    %38 = vector.broadcast %20 : vector<1x128xf32> to vector<16x128xf32>
    %39 = arith.mulf %37, %38 : vector<16x128xf32>
    %40 = arith.addf %30, %39 : vector<16x128xf32>
    %c0_13 = arith.constant 0 : index
    %c0_14 = arith.constant 0 : index
    %41 = vector.load %arg3[%c0_13, %c0_14] : memref<16x128xf32, #tpu.memory_space<vmem>>, vector<16x128xf32>
    tpu.vector_store %arg3[%c0_13, %c0_14], %40 {strides = array<i32>} : memref<16x128xf32, #tpu.memory_space<vmem>>, vector<16x128xf32>,
    return
  }
  func.func @transform_0(%arg0: i32) -> (i32, i32) {
    %c0_i32 = arith.constant 0 : i32
    %c0_i32_0 = arith.constant 0 : i32
    %c0_i32_1 = arith.constant 0 : i32
    return %c0_i32, %c0_i32_0 : i32, i32
  }
  func.func @transform_1(%arg0: i32) -> (i32, i32) {
    %c0_i32 = arith.constant 0 : i32
    %c0_i32_0 = arith.constant 0 : i32
    return %arg0, %c0_i32 : i32, i32
  }
  func.func @transform_2(%arg0: i32) -> (i32, i32) {
    %c0_i32 = arith.constant 0 : i32
    %c0_i32_0 = arith.constant 0 : i32
    return %arg0, %c0_i32 : i32, i32
  }
  func.func @transform_3(%arg0: i32) -> (i32, i32) {
    %c0_i32 = arith.constant 0 : i32
    %c0_i32_0 = arith.constant 0 : i32
    return %arg0, %c0_i32 : i32, i32
  }
}

</mosaic_0001>

<llo_original>
// kernel: tpu_custom_call.1
$region0: #{tpu_custom_call.1}
  #allocation0 [shape = 'u32[]', space=smem, size = 0x4, offset = 0x4, fixed_abs, tag = 'smem constant byte address 0x4 - core index']
  #allocation1 [shape = 'u32[144,128]{1,0:T(1,128)}', space=vmem, size = 0x12000, scoped, tag = 'internal scratch']
  %s0 = inlined_call_operand.vmem [shape: f32[2,128], index: 0, kind: input, shape index: {}]
  %s1 = inlined_call_operand.vmem [shape: f32[16,2], index: 1, kind: input, shape index: {}]
  %s2 = inlined_call_operand.hbm [shape: f32[16,128], index: 2, kind: output, shape index: {0}]
  %s3 = inlined_call_operand.vmem [shape: f32[16,4], index: 3, kind: output, shape index: {1}]
  %4 = xla_tuple %s2, %s3
  %s5 = sld [smem:[#allocation0]]
  $region26: #{tpu_custom_call.1} parent=0
    _
  %s7 = ssub.s32 1, %s5
  %s8 = scalar_select 0, %s7, %s5
  $region1: #{tpu_custom_call.1} parent=0
    #allocation2 [shape = 'u8[8192]{0}', space=vmem, size = 0x2000, scoped, tag = 'output window, operand 0, single buffered']
    #allocation3 [shape = 's32[1]{0}', space=sflag, size = 0x4, scoped, tag = 'scoped memory for tpu_custom_call.1']
    %9 = vsyncpa [#allocation3], 0
    // Predicated region
    $region2: #{tpu_custom_call.1} parent=1 // pred_check
      _
    $region3: #{tpu_custom_call.1} parent=1 // pred_check_branch
      %11 = sbr.rel (0) target = $region5
    $region4: #{tpu_custom_call.1} parent=1 // pred_region
      _
    $region5: #{tpu_custom_call.1} parent=1 // pred_fallthru
      _
    // Predicated region
    $region6: #{tpu_custom_call.1} parent=1 // pred_check
      _
    $region7: #{tpu_custom_call.1} parent=1 // pred_check_branch
      %13 = sbr.rel (0) target = $region9
    $region8: #{tpu_custom_call.1} parent=1 // pred_region
      _
    $region9: #{tpu_custom_call.1} parent=1 // pred_fallthru
      _
    %v14 = vld [vmem:[%s1] sm:$0xff]
    %v15 = vld [vmem:[%s1 + $0x8] sm:$0xff]
    %v16 = vsub.f32 %v14, 0.25
    %v17 = vsub.f32 %v15, 0.25
    %v18 = vmax.f32 %v16, 0.0
    %v19 = vmax.f32 %v17, 0.0
    %v20 = vmin.f32 %v18, 1.0
    %v21 = vmin.f32 %v19, 1.0
    %v22 = vadd.f32 %v14, 0.25
    %v23 = vadd.f32 %v15, 0.25
    %v24 = vmax.f32 %v22, 0.0
    %v25 = vmax.f32 %v23, 0.0
    %v26 = vmin.f32 %v24, 1.0
    %v27 = vmin.f32 %v25, 1.0
    %v28 = vsub.f32 %v26, %v20
    %v29 = vsub.f32 %v27, %v21
    %vm30 = vcmask 15360
    %31 = vst.msk [vmem:[%s3] sm:$0xff] %vm30, %v20
    %32 = vst.msk [vmem:[%s3 + $0x8] sm:$0xff] %vm30, %v21
    %35 = vrot.lane.b32.xlu0 %v28, 2
    %v36 = vpop.permute.xlu0 %35
    %37 = vrot.lane.b32.xlu0 %v29, 2
    %v38 = vpop.permute.xlu0 %37
    %vm41 = vcmask 31760
    %42 = vst.msk [vmem:[%s3] sm:$0xff] %vm41, %v36
    %43 = vst.msk [vmem:[%s3 + $0x8] sm:$0xff] %vm41, %v38
    %v44 = vld [vmem:[%s0] sm:$0x1]
    %v45 = vld [vmem:[%s0 + $0x1] sm:$0x1]
    %vm46 = vcmp.gt.f32.partialorder %v45, 0.5
    %v47 = vsel %vm46, 1, 0
    %v48 = vlaneseq
    %v49 = vshrl.u32 %v48, 7
    %v50 = vsub.s32 0, %v49
    %v51 = vrot.slane %v47, %v50
    %vm52 = vcmp.eq.s32.totalorder %v51, 1
    %54 = vset.pattern.permute.xlu0 0
    %55 = vperm.xlu0 %54, %v20
    %v56 = vpop.permute.xlu0 %55
    %59 = vset.pattern.permute.xlu0 0
    %60 = vperm.xlu0 %59, %v21
    %v61 = vpop.permute.xlu0 %60
    %63 = vset.pattern.permute.xlu0 1
    %64 = vperm.xlu0 %63, %v20
    %v65 = vpop.permute.xlu0 %64
    %67 = vset.pattern.permute.xlu0 1
    %68 = vperm.xlu0 %67, %v21
    %v69 = vpop.permute.xlu0 %68
    %v71 = vsel %vm52, %v56, %v65
    %v72 = vsel %vm52, %v61, %v69
    %73 = vset.pattern.permute.xlu0 0
    %74 = vperm.xlu0 %73, %v28
    %v75 = vpop.permute.xlu0 %74
    %77 = vset.pattern.permute.xlu0 0
    %78 = vperm.xlu0 %77, %v29
    %v79 = vpop.permute.xlu0 %78
    %81 = vset.pattern.permute.xlu0 1
    %82 = vperm.xlu0 %81, %v28
    %v83 = vpop.permute.xlu0 %82
    %85 = vset.pattern.permute.xlu0 1
    %86 = vperm.xlu0 %85, %v29
    %v87 = vpop.permute.xlu0 %86
    %v89 = vsel %vm52, %v75, %v83
    %v90 = vsel %vm52, %v79, %v87
    %v91 = vlaneseq
    %v92 = vshrl.u32 %v91, 7
    %v93 = vsub.s32 0, %v92
    %v94 = vrot.slane %v44, %v93
    %v95 = vmul.f32 %v89, %v94
    %v96 = vmul.f32 %v90, %v94
    %v97 = vadd.f32 %v71, %v95
    %v98 = vadd.f32 %v72, %v96
    %99 = vst [vmem:[#allocation2] sm:$0xff] %v97
    %100 = vst [vmem:[#allocation2 + $0x8] sm:$0xff] %v98
    // Predicated region
    $region10: #{tpu_custom_call.1} parent=1 // pred_check
      _
    $region11: #{tpu_custom_call.1} parent=1 // pred_check_branch
      %102 = sbr.rel (0) target = $region13
    $region12: #{tpu_custom_call.1} parent=1 // pred_region
      %s104 = ssub.s32 256, 256
      %105 = vsyncadd [#allocation3], %s104
      %s106 = sshll.u32 [#allocation2], 4
      %s107 = int_to_ptr.vmem [resolvable:$true] %s106
      %112 = dma.vmem_to_hbm [thread:$0]  %s107, 256, %s2, [#allocation3], 128, 128, 8
    $region13: #{tpu_custom_call.1} parent=1 // pred_fallthru
      _
    // Predicated region
    $region14: #{tpu_custom_call.1} parent=1 // pred_check
      _
    $region15: #{tpu_custom_call.1} parent=1 // pred_check_branch
      %114 = sbr.rel (0) target = $region17
    $region16: #{tpu_custom_call.1} parent=1 // pred_region
      _
    $region17: #{tpu_custom_call.1} parent=1 // pred_fallthru
      _
    // Predicated region
    $region18: #{tpu_custom_call.1} parent=1 // pred_check
      _
    $region19: #{tpu_custom_call.1} parent=1 // pred_check_branch
      %116 = sbr.rel (0) target = $region21
    $region20: #{tpu_custom_call.1} parent=1 // pred_region
      %117 = dma.done [#allocation3], 256
    $region21: #{tpu_custom_call.1} parent=1 // pred_fallthru
      _
    // Predicated region
    $region22: #{tpu_custom_call.1} parent=1 // pred_check
      _
    $region23: #{tpu_custom_call.1} parent=1 // pred_check_branch
      %119 = sbr.rel (0) target = $region25
    $region24: #{tpu_custom_call.1} parent=1 // pred_region
      _
    $region25: #{tpu_custom_call.1} parent=1 // pred_fallthru
      _
    %120 = vsyncpa [#allocation3], 1

</llo_original>
